<compile_context>
chip_gen: v7x
topology: tpu7x:2x2x1
jax: 0.10.0
libtpu: 0.0.40
codegen_flags: <defaults>
</compile_context>

<pallas_src>
import functools

import jax
import jax.numpy as jnp
from jax.experimental import pallas as pl
from jax.experimental.pallas import tpu as pltpu


# --------------------------- small (no-grid) path ---------------------------
def _agg_small_kernel(x_ref, o_ref, *, inv_count):
    """Whole (N, M, H) tensor resident in VMEM; fused f32 sum + one scale."""
    x = x_ref[...].astype(jnp.float32)            # (N, M, H) -> f32
    s = jnp.sum(x, axis=0)                        # (M, H)  pure VPU vreg adds
    s = jnp.sum(s, axis=0, keepdims=True)         # (1, H)  one sublane reduce
    o_ref[...] = (s * inv_count)[None].astype(o_ref.dtype)   # (1, 1, H)


def _forward_small(fusion_state):
    n, m, h = fusion_state.shape
    inv_count = float(1.0 / (n * m))
    return pl.pallas_call(
        functools.partial(_agg_small_kernel, inv_count=inv_count),
        out_shape=jax.ShapeDtypeStruct((1, 1, h), fusion_state.dtype),
        in_specs=[pl.BlockSpec(memory_space=pltpu.MemorySpace.VMEM)],
        out_specs=pl.BlockSpec(memory_space=pltpu.MemorySpace.VMEM),
    )(fusion_state)


# ----------------------------- tiled (grid) path ----------------------------
def _agg_tiled_kernel(x_ref, o_ref, acc_ref, *, inv_count):
    """Grid over flattened rows; (8, H) f32 accumulator, finalize on last step."""
    k = pl.program_id(0)

    @pl.when(k == 0)
    def _init():
        acc_ref[...] = jnp.zeros_like(acc_ref)

    t, h = x_ref.shape
    # (T, H) -> (T//8, 8, H): sublane-tile split, layout-preserving (T % 8 == 0).
    x = x_ref[...].astype(jnp.float32).reshape(t // 8, 8, h)
    acc_ref[...] += jnp.sum(x, axis=0)            # lockstep VPU adds, no XLU

    @pl.when(k == pl.num_programs(0) - 1)
    def _finalize():
        total = jnp.sum(acc_ref[...], axis=0, keepdims=True)   # (1, H) XLU once
        o_ref[...] = (total * inv_count)[None].astype(o_ref.dtype)   # (1, 1, H)


def _forward_tiled(fusion_state, *, row_tile):
    n, m, h = fusion_state.shape
    r = n * m
    inv_count = float(1.0 / r)

    # Flatten leading dims (contiguous, metadata-only in the wrapper).
    x2d = fusion_state.reshape(r, h)

    # Row tile: multiple of 8 sublanes, no larger than needed. Default 512
    # keeps 2 buffers x (T x H x 4B) well under every generation's scoped
    # VMEM limit (v7x: 64 MiB physical / 32 MiB scoped) while reaching the
    # HBM-bandwidth roofline for this mem-bound reduction.
    t = max(8, min(row_tile, ((r + 7) // 8) * 8))
    t = ((t + 7) // 8) * 8

    # Pad rows to a multiple of the tile with zeros (zeros do not affect the
    # sum; we still divide by the true element count r).
    n_tiles = pl.cdiv(r, t)
    r_pad = n_tiles * t
    if r_pad != r:
        x2d = jnp.pad(x2d, ((0, r_pad - r), (0, 0)))

    return pl.pallas_call(
        functools.partial(_agg_tiled_kernel, inv_count=inv_count),
        out_shape=jax.ShapeDtypeStruct((1, 1, h), fusion_state.dtype),
        grid=(n_tiles,),
        in_specs=[pl.BlockSpec((t, h), lambda k: (k, 0))],
        out_specs=pl.BlockSpec((1, 1, h), lambda k: (0, 0, 0)),
        scratch_shapes=[pltpu.VMEM((8, h), jnp.float32)],
        compiler_params=pltpu.CompilerParams(
            dimension_semantics=("arbitrary",)),
    )(x2d)


# --------------------------------- wrapper -----------------------------------
def elice_aggregator_forward(fusion_state,
                             *,
                             small_path_max_bytes=4 * 1024 * 1024,
                             row_tile=512):
    """fusion_state.mean(0, keepdim=True).mean(1, keepdim=True).

    Small inputs take a single no-grid VMEM-resident kernel; larger inputs
    take a pipelined grid reduction over flattened rows. The 4 MiB default
    threshold is safe on v5e (16 MiB scoped VMEM default), v6e and v7x.
    """
    nbytes = fusion_state.size * fusion_state.dtype.itemsize
    if nbytes <= small_path_max_bytes:
        return _forward_small(fusion_state)
    return _forward_tiled(fusion_state, row_tile=row_tile)


# ----------------------------------- main ------------------------------------
if __name__ == "__main__":
    key = jax.random.PRNGKey(0)
    k0, k1 = jax.random.split(key)

    # ---- Path 1: tiny input, no-grid fused kernel (H=128 -> lane-dense). ----
    N, M, H = 4, 16, 128
    x = jax.random.normal(k0, (N, M, H), dtype=jnp.float32)

    out = jax.block_until_ready(elice_aggregator_forward(x))
    ref = jnp.mean(jnp.mean(x, axis=0, keepdims=True), axis=1, keepdims=True)
    assert out.shape == (1, 1, H)
    assert jnp.allclose(out, ref, rtol=1e-6, atol=1e-6)

    # ---- Path 2: force the tiled/grid reduction path (still small). ---------
    N2, M2 = 8, 64
    x2 = jax.random.normal(k1, (N2, M2, H), dtype=jnp.float32)
    out2 = jax.block_until_ready(
        elice_aggregator_forward(x2, small_path_max_bytes=0, row_tile=128))
    ref2 = jnp.mean(jnp.mean(x2, axis=0, keepdims=True), axis=1, keepdims=True)
    assert out2.shape == (1, 1, H)
    assert jnp.allclose(out2, ref2, rtol=1e-5, atol=1e-5)

    # ---- Path 3: bf16 input, f32 accumulation inside the kernel. ------------
    xb = x.astype(jnp.bfloat16)
    out_b = jax.block_until_ready(elice_aggregator_forward(xb))
    ref_b = (jnp.mean(xb.astype(jnp.float32).reshape(-1, H), axis=0,
                      keepdims=True).reshape(1, 1, H)).astype(jnp.bfloat16)
    assert out_b.shape == (1, 1, H)
    assert jnp.allclose(out_b.astype(jnp.float32), ref_b.astype(jnp.float32),
                        rtol=2e-2, atol=2e-2)

    print("KERNEL_OK")
</pallas_src>

<mosaic_0001>
module attributes {stable_mosaic.version = 11 : i64} {
  func.func @_agg_small_kernel(%arg0: memref<4x16x128xf32, #tpu.memory_space<vmem>>, %arg1: memref<1x1x128xf32, #tpu.memory_space<vmem>>) attributes {dimension_semantics = [], scalar_prefetch = 0 : i64, scratch_operands = 0 : i64, tpu.core_type = #tpu.core_type<tc>} {
    %c0 = arith.constant 0 : index
    %c0_0 = arith.constant 0 : index
    %c0_1 = arith.constant 0 : index
    %0 = vector.load %arg0[%c0, %c0_0, %c0_1] : memref<4x16x128xf32, #tpu.memory_space<vmem>>, vector<4x16x128xf32>
    %cst = arith.constant dense<0.000000e+00> : vector<16x128xf32>
    %1 = vector.multi_reduction <add>, %0, %cst [0] : vector<4x16x128xf32> to vector<16x128xf32>
    %cst_2 = arith.constant dense<0.000000e+00> : vector<128xf32>
    %2 = vector.multi_reduction <add>, %1, %cst_2 [0] : vector<16x128xf32> to vector<128xf32>
    %3 = vector.shape_cast %2 : vector<128xf32> to vector<1x128xf32>
    %cst_3 = arith.constant 1.562500e-02 : f32
    %4 = vector.broadcast %cst_3 : f32 to vector<1x128xf32>
    %5 = arith.mulf %3, %4 : vector<1x128xf32>
    %6 = vector.shape_cast %5 : vector<1x128xf32> to vector<1x1x128xf32>
    %c0_4 = arith.constant 0 : index
    %c0_5 = arith.constant 0 : index
    %c0_6 = arith.constant 0 : index
    %7 = vector.load %arg1[%c0_4, %c0_5, %c0_6] : memref<1x1x128xf32, #tpu.memory_space<vmem>>, vector<1x1x128xf32>
    tpu.vector_store %arg1[%c0_4, %c0_5, %c0_6], %6 {strides = array<i32>} : memref<1x1x128xf32, #tpu.memory_space<vmem>>, vector<1x1x128xf32>,
    return
  }
}

</mosaic_0001>

<llo_original>
// kernel: tpu_custom_call.1
$region0: #{tpu_custom_call.1}
  #allocation0 [shape = 'u32[]', space=smem, size = 0x4, offset = 0x4, fixed_abs, tag = 'smem constant byte address 0x4 - core index']
  #allocation1 [shape = 'u32[144,128]{1,0:T(1,128)}', space=vmem, size = 0x12000, scoped, tag = 'internal scratch']
  %s0 = inlined_call_operand.hbm [shape: f32[4,16,128], index: 0, kind: input, shape index: {}]
  %s1 = inlined_call_operand.hbm [shape: f32[1,1,128], index: 1, kind: output, shape index: {}]
  %s2 = sld [smem:[#allocation0]]
  $region18: #{tpu_custom_call.1} parent=0
    _
  %s4 = ssub.s32 1, %s2
  %s5 = scalar_select 0, %s4, %s2
  $region1: #{tpu_custom_call.1} parent=0
    #allocation2 [shape = 'u8[32768]{0}', space=vmem, size = 0x8000, scoped, tag = 'input window, operand 0, single buffered']
    #allocation3 [shape = 's32[1]{0}', space=sflag, size = 0x4, scoped, tag = 'scoped memory for tpu_custom_call.1']
    #allocation4 [shape = 's32[1]{0}', space=sflag, size = 0x4, scoped, tag = 'scoped memory for tpu_custom_call.1']
    #allocation5 [shape = 'u8[512]{0}', space=vmem, size = 0x400, scoped, tag = 'output window, operand 0, single buffered']
    %6 = vsyncpa [#allocation3], 0
    %7 = vsyncpa [#allocation4], 0
    // Predicated region
    $region2: #{tpu_custom_call.1} parent=1 // pred_check
      _
    $region3: #{tpu_custom_call.1} parent=1 // pred_check_branch
      %9 = sbr.rel (0) target = $region5
    $region4: #{tpu_custom_call.1} parent=1 // pred_region
      %s11 = ssub.s32 1024, 1024
      %12 = vsyncadd [#allocation3], %s11
      %s13 = sshll.u32 [#allocation2], 4
      %s14 = int_to_ptr.vmem [resolvable:$true] %s13
      %19 = dma.hbm_to_vmem [thread:$0]  %s0, 1024, %s14, [#allocation3], 128, 128, 8
    $region5: #{tpu_custom_call.1} parent=1 // pred_fallthru
      _
    // Predicated region
    $region6: #{tpu_custom_call.1} parent=1 // pred_check
      _
    $region7: #{tpu_custom_call.1} parent=1 // pred_check_branch
      %21 = sbr.rel (0) target = $region9
    $region8: #{tpu_custom_call.1} parent=1 // pred_region
      %22 = dma.done [#allocation3], 1024
    $region9: #{tpu_custom_call.1} parent=1 // pred_fallthru
      _
    %v23 = vld [vmem:[#allocation2] sm:$0xff]
    %v24 = vld [vmem:[#allocation2 + $0x8] sm:$0xff]
    %v25 = vld [vmem:[#allocation2 + $0x10] sm:$0xff]
    %v26 = vld [vmem:[#allocation2 + $0x18] sm:$0xff]
    %v27 = vld [vmem:[#allocation2 + $0x20] sm:$0xff]
    %v28 = vld [vmem:[#allocation2 + $0x28] sm:$0xff]
    %v29 = vld [vmem:[#allocation2 + $0x30] sm:$0xff]
    %v30 = vld [vmem:[#allocation2 + $0x38] sm:$0xff]
    %v31 = vadd.f32 %v23, %v25
    %v32 = vadd.f32 %v31, %v27
    %v33 = vadd.f32 %v32, %v29
    %v34 = vadd.f32 %v24, %v26
    %v35 = vadd.f32 %v34, %v28
    %v36 = vadd.f32 %v35, %v30
    %v37 = vadd.f32 %v33, %v36
    %v38 = vrot.slane %v37, 4
    %v39 = vadd.f32 %v37, %v38
    %v40 = vrot.slane %v39, 2
    %v41 = vadd.f32 %v39, %v40
    %v42 = vrot.slane %v41, 1
    %v43 = vadd.f32 %v41, %v42
    %v44 = vmul.f32 %v43, 0.015625
    %45 = vst [vmem:[#allocation5] sm:$0x1] %v44
    // Predicated region
    $region10: #{tpu_custom_call.1} parent=1 // pred_check
      _
    $region11: #{tpu_custom_call.1} parent=1 // pred_check_branch
      %47 = sbr.rel (0) target = $region13
    $region12: #{tpu_custom_call.1} parent=1 // pred_region
      %s49 = ssub.s32 16, 16
      %50 = vsyncadd [#allocation4], %s49
      %s52 = sshll.u32 [#allocation5], 4
      %s53 = int_to_ptr.vmem [resolvable:$true] %s52
      %55 = dma.vmem_to_hbm [thread:$0]  %s53, 16, %s1, [#allocation4]
    $region13: #{tpu_custom_call.1} parent=1 // pred_fallthru
      _
    // Predicated region
    $region14: #{tpu_custom_call.1} parent=1 // pred_check
      _
    $region15: #{tpu_custom_call.1} parent=1 // pred_check_branch
      %57 = sbr.rel (0) target = $region17
    $region16: #{tpu_custom_call.1} parent=1 // pred_region
      %58 = dma.done [#allocation4], 16
    $region17: #{tpu_custom_call.1} parent=1 // pred_fallthru
      _
    %59 = vsyncpa [#allocation3], 1
    %60 = vsyncpa [#allocation4], 1

</llo_original>
